<compile_context>
chip_gen: v6e
topology: v6e:2x2x1
jax: 0.10.0
libtpu: 0.0.40
codegen_flags: <defaults>
</compile_context>

<pallas_src>
import jax
import jax.numpy as jnp
from jax import lax
from jax.experimental import pallas as pl
from jax.experimental.pallas import tpu as pltpu

IN_F = 66
HID_F = 6
OUT_F = 1

# Default batch tile.  VMEM cost per input buffer: TILE_B x 128 lanes x 4 B
# (= 1 MiB at 2048) x 2 buffers -> comfortably inside the scoped-VMEM default
# on v5e (16 MiB), v6e/v7x (32 MiB).  512-1024 rows already reach ~85% of HBM
# roofline, so there is no need for giant tiles.
DEFAULT_TILE_B = 2048


def _round_up(n: int, m: int) -> int:
    return ((n + m - 1) // m) * m


def ffn_kernel(x_ref, w1_ref, b1_ref, w2_ref, b2_ref, o_ref):
    # x_ref : (TILE_B, 66)   input rows, features on lanes
    # w1_ref: (6, 66)        PyTorch (out, in) layout
    # b1_ref: (6, 1)
    # w2_ref: (6, 1)
    # b2_ref: (1, 1)
    # o_ref : (1, TILE_B)    lane-dense output row (batch on lanes)
    x = x_ref[...]

    # full1: h^T = W1 @ x^T  -> (6, TILE_B).  Contraction is on the minor
    # (lane) axis of both operands (classic A @ B^T MXU pattern), so no
    # transpose is materialized and the result is lane-dense in batch.
    h = lax.dot_general(
        w1_ref[...], x,
        dimension_numbers=(((1,), (1,)), ((), ())),
        preferred_element_type=jnp.float32,
    )
    h = jnp.maximum(h + b1_ref[...], 0.0)          # bias bcast over lanes, ReLU

    # full2 (K=6, N=1): VPU multiply + sublane reduce instead of an MXU matmul
    # that would waste the whole systolic array.
    z = jnp.sum(h * w2_ref[...], axis=0, keepdims=True) + b2_ref[...]  # (1, TILE_B)

    o_ref[...] = jax.nn.sigmoid(z).astype(o_ref.dtype)


def feed_forward_network(x, w1, b1, w2, b2, *, tile_b: int = DEFAULT_TILE_B):
    """x: (B, 66); w1: (6, 66) torch (out,in); b1: (6,1); w2: (6,1); b2: (1,1).

    Returns (B, 1) = sigmoid(relu(x @ w1.T + b1.T) @ w2 + b2.T).
    """
    B = x.shape[0]
    # Output lane dim must be a multiple of 128; don't over-pad tiny batches.
    tile_b = min(tile_b, _round_up(max(B, 1), 128))
    b_pad = _round_up(B, tile_b)
    if b_pad != B:
        x = jnp.pad(x, ((0, b_pad - B), (0, 0)))
    grid = (b_pad // tile_b,)

    itemsize = x.dtype.itemsize
    cost = pl.CostEstimate(
        flops=2 * B * (IN_F * HID_F + HID_F * OUT_F),
        transcendentals=B,  # sigmoid exp
        bytes_accessed=B * IN_F * itemsize
        + B * OUT_F * itemsize
        + (HID_F * IN_F + 2 * HID_F + OUT_F) * 4,
    )

    out_t = pl.pallas_call(
        ffn_kernel,
        out_shape=jax.ShapeDtypeStruct((1, b_pad), x.dtype),
        grid=grid,
        in_specs=[
            # x: streamed per batch tile (double-buffered by Pallas).
            pl.BlockSpec((tile_b, IN_F), lambda i: (i, 0)),
            # Weights/biases: constant block index -> fetched once, stay resident.
            pl.BlockSpec((HID_F, IN_F), lambda i: (0, 0)),
            pl.BlockSpec((HID_F, 1), lambda i: (0, 0)),
            pl.BlockSpec((HID_F, 1), lambda i: (0, 0)),
            pl.BlockSpec((1, 1), lambda i: (0, 0)),
        ],
        out_specs=pl.BlockSpec((1, tile_b), lambda i: (0, i)),
        compiler_params=pltpu.CompilerParams(
            dimension_semantics=("parallel",),  # megacore sharding on v7x
        ),
        cost_estimate=cost,
    )(x, w1, b1, w2, b2)

    # (1, b_pad) -> (B, 1)
    return out_t[0, :B].reshape(B, OUT_F)


def init_params(key):
    """nn.Linear-style init (uniform +-1/sqrt(fan_in)); torch (out,in) weight layout."""
    k1, k2, k3, k4 = jax.random.split(key, 4)
    bound1 = 1.0 / jnp.sqrt(IN_F)
    bound2 = 1.0 / jnp.sqrt(HID_F)
    w1 = jax.random.uniform(k1, (HID_F, IN_F), jnp.float32, -bound1, bound1)
    b1 = jax.random.uniform(k2, (HID_F, 1), jnp.float32, -bound1, bound1)
    w2 = jax.random.uniform(k3, (HID_F, OUT_F), jnp.float32, -bound2, bound2)
    b2 = jax.random.uniform(k4, (OUT_F, 1), jnp.float32, -bound2, bound2)
    return w1, b1, w2, b2


def reference(x, w1, b1, w2, b2):
    h = jnp.maximum(x @ w1.T + b1[:, 0], 0.0)      # (B, 6)
    return jax.nn.sigmoid(h @ w2 + b2[0])          # (B, 1)


if __name__ == "__main__":
    key = jax.random.PRNGKey(0)
    k_x, k_x2, k_p = jax.random.split(key, 3)
    w1, b1, w2, b2 = init_params(k_p)

    # Small case (single tile).
    B = 8
    x = jax.random.normal(k_x, (B, IN_F), jnp.float32)
    out = jax.block_until_ready(feed_forward_network(x, w1, b1, w2, b2))
    ref = reference(x, w1, b1, w2, b2)
    assert out.shape == (B, OUT_F)
    assert jnp.allclose(out, ref, atol=2e-5, rtol=1e-5)

    # Multi-tile + ragged-tail case (exercises the batch grid and padding path).
    B2 = 300
    x2 = jax.random.normal(k_x2, (B2, IN_F), jnp.float32)
    out2 = jax.block_until_ready(
        feed_forward_network(x2, w1, b1, w2, b2, tile_b=128))
    ref2 = reference(x2, w1, b1, w2, b2)
    assert out2.shape == (B2, OUT_F)
    assert jnp.allclose(out2, ref2, atol=2e-5, rtol=1e-5)

    print("KERNEL_OK")
</pallas_src>

<mosaic_0001>
module attributes {stable_mosaic.version = 11 : i64} {
  func.func @ffn_kernel(%arg0: i32, %arg1: memref<128x66xf32, #tpu.memory_space<vmem>>, %arg2: memref<6x66xf32, #tpu.memory_space<vmem>>, %arg3: memref<6x1xf32, #tpu.memory_space<vmem>>, %arg4: memref<6x1xf32, #tpu.memory_space<vmem>>, %arg5: memref<1x1xf32, #tpu.memory_space<vmem>>, %arg6: memref<1x128xf32, #tpu.memory_space<vmem>>) attributes {dimension_semantics = [#tpu.dimension_semantics<parallel>], iteration_bounds = array<i64: 1>, scalar_prefetch = 0 : i64, scratch_operands = 0 : i64, tpu.core_type = #tpu.core_type<tc>, window_params = [{transform_indices = @transform_0, window_bounds = array<i64: 128, 66>}, {pipeline_mode = #tpu.pipeline_mode<synchronous>, transform_indices = @transform_1, window_bounds = array<i64: 6, 66>}, {pipeline_mode = #tpu.pipeline_mode<synchronous>, transform_indices = @transform_2, window_bounds = array<i64: 6, 1>}, {pipeline_mode = #tpu.pipeline_mode<synchronous>, transform_indices = @transform_3, window_bounds = array<i64: 6, 1>}, {pipeline_mode = #tpu.pipeline_mode<synchronous>, transform_indices = @transform_4, window_bounds = array<i64: 1, 1>}, {transform_indices = @transform_5, window_bounds = array<i64: 1, 128>}]} {
    %c0 = arith.constant 0 : index
    %c0_0 = arith.constant 0 : index
    %0 = vector.load %arg1[%c0, %c0_0] : memref<128x66xf32, #tpu.memory_space<vmem>>, vector<128x66xf32>
    %c0_1 = arith.constant 0 : index
    %c0_2 = arith.constant 0 : index
    %1 = vector.load %arg2[%c0_1, %c0_2] : memref<6x66xf32, #tpu.memory_space<vmem>>, vector<6x66xf32>
    %cst = arith.constant dense<0.000000e+00> : vector<6x128xf32>
    %2 = tpu.matmul %1, %0, %cst {dimension_numbers = #tpu.dot_dimension_numbers<[1], [1], [0], [0], [0, 0, 1, 0], [], []>} : vector<6x66xf32>, vector<128x66xf32>, vector<6x128xf32> -> vector<6x128xf32>
    %c0_3 = arith.constant 0 : index
    %c0_4 = arith.constant 0 : index
    %3 = vector.load %arg3[%c0_3, %c0_4] : memref<6x1xf32, #tpu.memory_space<vmem>>, vector<6x1xf32>
    %4 = vector.broadcast %3 : vector<6x1xf32> to vector<6x128xf32>
    %5 = arith.addf %2, %4 : vector<6x128xf32>
    %cst_5 = arith.constant 0.000000e+00 : f32
    %6 = vector.broadcast %cst_5 : f32 to vector<6x128xf32>
    %7 = arith.maximumf %5, %6 : vector<6x128xf32>
    %c0_6 = arith.constant 0 : index
    %c0_7 = arith.constant 0 : index
    %8 = vector.load %arg4[%c0_6, %c0_7] : memref<6x1xf32, #tpu.memory_space<vmem>>, vector<6x1xf32>
    %9 = vector.broadcast %8 : vector<6x1xf32> to vector<6x128xf32>
    %10 = arith.mulf %7, %9 : vector<6x128xf32>
    %cst_8 = arith.constant dense<0.000000e+00> : vector<128xf32>
    %11 = vector.multi_reduction <add>, %10, %cst_8 [0] : vector<6x128xf32> to vector<128xf32>
    %12 = vector.shape_cast %11 : vector<128xf32> to vector<1x128xf32>
    %c0_9 = arith.constant 0 : index
    %c0_10 = arith.constant 0 : index
    %13 = vector.load %arg5[%c0_9, %c0_10] : memref<1x1xf32, #tpu.memory_space<vmem>>, vector<1x1xf32>
    %14 = vector.broadcast %13 : vector<1x1xf32> to vector<1x128xf32>
    %15 = arith.addf %12, %14 : vector<1x128xf32>
    %16 = arith.negf %15 : vector<1x128xf32>
    %17 = math.exp %16 : vector<1x128xf32>
    %cst_11 = arith.constant 1.000000e+00 : f32
    %18 = vector.broadcast %cst_11 : f32 to vector<1x128xf32>
    %19 = arith.addf %18, %17 : vector<1x128xf32>
    %20 = arith.divf %18, %19 : vector<1x128xf32>
    %c0_12 = arith.constant 0 : index
    %c0_13 = arith.constant 0 : index
    %21 = vector.load %arg6[%c0_12, %c0_13] : memref<1x128xf32, #tpu.memory_space<vmem>>, vector<1x128xf32>
    tpu.vector_store %arg6[%c0_12, %c0_13], %20 {strides = array<i32>} : memref<1x128xf32, #tpu.memory_space<vmem>>, vector<1x128xf32>,
    return
  }
  func.func @transform_0(%arg0: i32) -> (i32, i32) {
    %c0_i32 = arith.constant 0 : i32
    %c0_i32_0 = arith.constant 0 : i32
    return %arg0, %c0_i32 : i32, i32
  }
  func.func @transform_1(%arg0: i32) -> (i32, i32) {
    %c0_i32 = arith.constant 0 : i32
    %c0_i32_0 = arith.constant 0 : i32
    %c0_i32_1 = arith.constant 0 : i32
    return %c0_i32, %c0_i32_0 : i32, i32
  }
  func.func @transform_2(%arg0: i32) -> (i32, i32) {
    %c0_i32 = arith.constant 0 : i32
    %c0_i32_0 = arith.constant 0 : i32
    %c0_i32_1 = arith.constant 0 : i32
    return %c0_i32, %c0_i32_0 : i32, i32
  }
  func.func @transform_3(%arg0: i32) -> (i32, i32) {
    %c0_i32 = arith.constant 0 : i32
    %c0_i32_0 = arith.constant 0 : i32
    %c0_i32_1 = arith.constant 0 : i32
    return %c0_i32, %c0_i32_0 : i32, i32
  }
  func.func @transform_4(%arg0: i32) -> (i32, i32) {
    %c0_i32 = arith.constant 0 : i32
    %c0_i32_0 = arith.constant 0 : i32
    %c0_i32_1 = arith.constant 0 : i32
    return %c0_i32, %c0_i32_0 : i32, i32
  }
  func.func @transform_5(%arg0: i32) -> (i32, i32) {
    %c0_i32 = arith.constant 0 : i32
    %c0_i32_0 = arith.constant 0 : i32
    return %c0_i32, %arg0 : i32, i32
  }
}

</mosaic_0001>

<llo_original>
// kernel: tpu_custom_call.1
$region0: #{tpu_custom_call.1}
  #allocation0 [shape = 'u32[]', space=smem, size = 0x4, offset = 0x4, fixed_abs, tag = 'smem constant byte address 0x4 - core index']
  #allocation1 [shape = 'u32[144,128]{1,0:T(1,128)}', space=vmem, size = 0x12000, scoped, tag = 'internal scratch']
  #allocation2 [shape = 'f32[1,1]{1,0:T(1,128)S(1)}', space=vmem, size = 0x200, scoped, tag = 'scoped memory for tpu_custom_call.1']
  %s0 = inlined_call_operand.vmem [shape: f32[128,66], index: 0, kind: input, shape index: {}]
  %s1 = inlined_call_operand.vmem [shape: f32[6,66], index: 1, kind: input, shape index: {}]
  %s2 = inlined_call_operand.vmem [shape: f32[6,1], index: 2, kind: input, shape index: {}]
  %s3 = inlined_call_operand.vmem [shape: f32[6,1], index: 3, kind: input, shape index: {}]
  %s4 = inlined_call_operand.<no memory space> [shape: f32[1,1], index: 4, kind: input, shape index: {}]
  %s5 = inlined_call_operand.hbm [shape: f32[1,128], index: 5, kind: output, shape index: {}]
  %s6 = sld [smem:[#allocation0]]
  $region30: #{tpu_custom_call.1} parent=0
    _
  %s8 = ssub.s32 1, %s6
  %s9 = scalar_select 0, %s8, %s6
  %v10 = vstv %s4
  %11 = vst [vmem:[#allocation2] sm:$0x1] %v10
  $region1: #{tpu_custom_call.1} parent=0
    #allocation3 [shape = 'u8[512]{0}', space=vmem, size = 0x400, scoped, tag = 'output window, operand 0, single buffered']
    #allocation4 [shape = 's32[1]{0}', space=sflag, size = 0x4, scoped, tag = 'scoped memory for tpu_custom_call.1']
    %12 = vsyncpa [#allocation4], 0
    // Predicated region
    $region2: #{tpu_custom_call.1} parent=1 // pred_check
      _
    $region3: #{tpu_custom_call.1} parent=1 // pred_check_branch
      %14 = sbr.rel (0) target = $region5
    $region4: #{tpu_custom_call.1} parent=1 // pred_region
      _
    $region5: #{tpu_custom_call.1} parent=1 // pred_fallthru
      _
    // Predicated region
    $region6: #{tpu_custom_call.1} parent=1 // pred_check
      _
    $region7: #{tpu_custom_call.1} parent=1 // pred_check_branch
      %16 = sbr.rel (0) target = $region9
    $region8: #{tpu_custom_call.1} parent=1 // pred_region
      _
    $region9: #{tpu_custom_call.1} parent=1 // pred_fallthru
      _
    // Predicated region
    $region10: #{tpu_custom_call.1} parent=1 // pred_check
      _
    $region11: #{tpu_custom_call.1} parent=1 // pred_check_branch
      %18 = sbr.rel (0) target = $region13
    $region12: #{tpu_custom_call.1} parent=1 // pred_region
      _
    $region13: #{tpu_custom_call.1} parent=1 // pred_fallthru
      _
    // Predicated region
    $region14: #{tpu_custom_call.1} parent=1 // pred_check
      _
    $region15: #{tpu_custom_call.1} parent=1 // pred_check_branch
      %20 = sbr.rel (0) target = $region17
    $region16: #{tpu_custom_call.1} parent=1 // pred_region
      _
    $region17: #{tpu_custom_call.1} parent=1 // pred_fallthru
      _
    // Predicated region
    $region18: #{tpu_custom_call.1} parent=1 // pred_check
      _
    $region19: #{tpu_custom_call.1} parent=1 // pred_check_branch
      %22 = sbr.rel (0) target = $region21
    $region20: #{tpu_custom_call.1} parent=1 // pred_region
      _
    $region21: #{tpu_custom_call.1} parent=1 // pred_fallthru
      _
    %v23 = vld [vmem:[%s0] sm:$0xff]
    %v24 = vld [vmem:[%s0 + $0x8] sm:$0xff]
    %v25 = vld [vmem:[%s0 + $0x10] sm:$0xff]
    %v26 = vld [vmem:[%s0 + $0x18] sm:$0xff]
    %v27 = vld [vmem:[%s0 + $0x20] sm:$0xff]
    %v28 = vld [vmem:[%s0 + $0x28] sm:$0xff]
    %v29 = vld [vmem:[%s0 + $0x30] sm:$0xff]
    %v30 = vld [vmem:[%s0 + $0x38] sm:$0xff]
    %v31 = vld [vmem:[%s0 + $0x40] sm:$0xff]
    %v32 = vld [vmem:[%s0 + $0x48] sm:$0xff]
    %v33 = vld [vmem:[%s0 + $0x50] sm:$0xff]
    %v34 = vld [vmem:[%s0 + $0x58] sm:$0xff]
    %v35 = vld [vmem:[%s0 + $0x60] sm:$0xff]
    %v36 = vld [vmem:[%s0 + $0x68] sm:$0xff]
    %v37 = vld [vmem:[%s0 + $0x70] sm:$0xff]
    %v38 = vld [vmem:[%s0 + $0x78] sm:$0xff]
    %v39 = vld [vmem:[%s1] sm:$0x3f]
    %v40 = vld [vmem:[%s2] sm:$0x3f]
    %42 = vset.pattern.permute.xlu0 0
    %43 = vperm.xlu0 %42, %v40
    %v44 = vpop.permute.xlu0 %43
    %vm46 = vcmask 539648
    %v48 = vsel %vm46, %v39, 0
    %v51 = vsel %vm46, %v23, 0
    %v54 = vsel %vm46, %v24, 0
    %v57 = vsel %vm46, %v25, 0
    %v60 = vsel %vm46, %v26, 0
    %v63 = vsel %vm46, %v27, 0
    %v66 = vsel %vm46, %v28, 0
    %v69 = vsel %vm46, %v29, 0
    %v72 = vsel %vm46, %v30, 0
    %v75 = vsel %vm46, %v31, 0
    %v78 = vsel %vm46, %v32, 0
    %v81 = vsel %vm46, %v33, 0
    %v84 = vsel %vm46, %v34, 0
    %v87 = vsel %vm46, %v35, 0
    %v90 = vsel %vm46, %v36, 0
    %v93 = vsel %vm46, %v37, 0
    %v96 = vsel %vm46, %v38, 0
    %98 = vmatprep.subr.mxu0 0.0
    %99 = vmatpush1.xpose.msra.mxu0 %v96
    %100 = vmatprep.subr.mxu0 0.0
    %101 = vmatpush1.xpose.msra.mxu0 %v93
    %102 = vmatprep.subr.mxu0 0.0
    %103 = vmatpush1.xpose.msra.mxu0 %v90
    %104 = vmatprep.subr.mxu0 0.0
    %105 = vmatpush1.xpose.msra.mxu0 %v87
    %106 = vmatprep.subr.mxu0 0.0
    %107 = vmatpush1.xpose.msra.mxu0 %v84
    %108 = vmatprep.subr.mxu0 0.0
    %109 = vmatpush1.xpose.msra.mxu0 %v81
    %110 = vmatprep.subr.mxu0 0.0
    %111 = vmatpush1.xpose.msra.mxu0 %v78
    %112 = vmatprep.subr.mxu0 0.0
    %113 = vmatpush1.xpose.msra.mxu0 %v75
    %114 = vmatprep.subr.mxu0 0.0
    %115 = vmatpush1.xpose.msra.mxu0 %v72
    %116 = vmatprep.subr.mxu0 0.0
    %117 = vmatpush1.xpose.msra.mxu0 %v69
    %118 = vmatprep.subr.mxu0 0.0
    %119 = vmatpush1.xpose.msra.mxu0 %v66
    %120 = vmatprep.subr.mxu0 0.0
    %121 = vmatpush1.xpose.msra.mxu0 %v63
    %122 = vmatprep.subr.mxu0 0.0
    %123 = vmatpush1.xpose.msra.mxu0 %v60
    %124 = vmatprep.subr.mxu0 0.0
    %125 = vmatpush1.xpose.msra.mxu0 %v57
    %126 = vmatprep.subr.mxu0 0.0
    %127 = vmatpush1.xpose.msra.mxu0 %v54
    %128 = vmatprep.subr.mxu0 0.0
    %129 = vmatpush1.xpose.msra.mxu0 %v51
    %130 = vmatprep.subr.mxu0 0.0
    %131 = vmatpush2.xpose.msra.mxu0 0.0
    %132 = vmatprep.subr.mxu0 0.0
    %133 = vmatpush2.xpose.msra.mxu0 0.0
    %134 = vmatprep.subr.mxu0 0.0
    %135 = vmatpush2.xpose.msra.mxu0 0.0
    %136 = vmatprep.subr.mxu0 0.0
    %137 = vmatpush2.xpose.msra.mxu0 0.0
    %138 = vmatprep.subr.mxu0 0.0
    %139 = vmatpush2.xpose.msra.mxu0 0.0
    %140 = vmatprep.subr.mxu0 0.0
    %141 = vmatpush2.xpose.msra.mxu0 0.0
    %142 = vmatprep.subr.mxu0 0.0
    %143 = vmatpush2.xpose.msra.mxu0 0.0
    %144 = vmatprep.subr.mxu0 0.0
    %145 = vmatpush2.xpose.msra.mxu0 0.0
    %146 = vmatprep.subr.mxu0 0.0
    %147 = vmatpush2.xpose.msra.mxu0 0.0
    %148 = vmatprep.subr.mxu0 0.0
    %149 = vmatpush2.xpose.msra.mxu0 0.0
    %150 = vmatprep.subr.mxu0 0.0
    %151 = vmatpush2.xpose.msra.mxu0 0.0
    %152 = vmatprep.subr.mxu0 0.0
    %153 = vmatpush2.xpose.msra.mxu0 0.0
    %154 = vmatprep.subr.mxu0 0.0
    %155 = vmatpush2.xpose.msra.mxu0 0.0
    %156 = vmatprep.subr.mxu0 0.0
    %157 = vmatpush2.xpose.msra.mxu0 0.0
    %158 = vmatprep.subr.mxu0 0.0
    %159 = vmatpush2.xpose.msra.mxu0 0.0
    %160 = vmatprep.subr.mxu0 0.0
    %161 = vmatpush2.xpose.msra.mxu0 0.0
    %162 = vmatprep.mubr.f32.mxu0 0.0
    %163 = vmatmul.mubr.f32.gmra.mxu0 %v48
    %v164 = vpop.f32.mrf.mxu0
    %v165 = vadd.f32 %v44, %v164
    %v166 = vpop.f32.mrf.mxu0
    %167 = vdwg.mxu0
    %v168 = vmax.f32 %v165, 0.0
    %v169 = vld [vmem:[%s3] sm:$0x3f]
    %171 = vset.pattern.permute.xlu0 0
    %172 = vperm.xlu0 %171, %v169
    %v173 = vpop.permute.xlu0 %172
    %v175 = vmul.f32 %v168, %v173
    %vm176 = vcmask 1045504
    %v177 = vsel %vm176, %v175, 0.0
    %v178 = vrot.slane %v177, 4
    %v179 = vadd.f32 %v177, %v178
    %v180 = vrot.slane %v179, 2
    %v181 = vadd.f32 %v179, %v180
    %v182 = vrot.slane %v181, 1
    %v183 = vadd.f32 %v181, %v182
    %v184 = vld [vmem:[#allocation2] sm:$0x1]
    %186 = vset.pattern.permute.xlu0 0
    %187 = vperm.xlu0 %186, %v184
    %v188 = vpop.permute.xlu0 %187
    %v190 = vlaneseq
    %v191 = vshrl.u32 %v190, 7
    %v192 = vsub.s32 0, %v191
    %v193 = vrot.slane %v188, %v192
    %v194 = vadd.f32 %v183, %v193
    %v195 = vxor.u32 %v194, 2147483648
    %v196 = vmul.f32 %v195, 1.442695
    %v197 = vpow.pop %v196
    %v198 = vadd.f32 %v197, 1.0
    %v199 = vrcp.pop %v198
    %v200 = vmul.f32 1.0, %v199
    %201 = vst [vmem:[#allocation3] sm:$0x1] %v200
    // Predicated region
    $region22: #{tpu_custom_call.1} parent=1 // pred_check
      _
    $region23: #{tpu_custom_call.1} parent=1 // pred_check_branch
      %203 = sbr.rel (0) target = $region25
    $region24: #{tpu_custom_call.1} parent=1 // pred_region
      %s205 = ssub.s32 16, 16
      %206 = vsyncadd [#allocation4], %s205
      %s208 = sshll.u32 [#allocation3], 4
      %s209 = int_to_ptr.vmem [resolvable:$true] %s208
      %211 = dma.vmem_to_hbm [thread:$0]  %s209, 16, %s5, [#allocation4]
    $region25: #{tpu_custom_call.1} parent=1 // pred_fallthru
      _
    // Predicated region
    $region26: #{tpu_custom_call.1} parent=1 // pred_check
      _
    $region27: #{tpu_custom_call.1} parent=1 // pred_check_branch
      %213 = sbr.rel (0) target = $region29
    $region28: #{tpu_custom_call.1} parent=1 // pred_region
      %214 = dma.done [#allocation4], 16
    $region29: #{tpu_custom_call.1} parent=1 // pred_fallthru
      _
    %215 = vsyncpa [#allocation4], 1

</llo_original>
